<compile_context>
chip_gen: v7x
topology: tpu7x:2x2x1
jax: 0.10.0
libtpu: 0.0.40
codegen_flags: <defaults>
</compile_context>

<pallas_src>
import jax
import jax.numpy as jnp
from jax import lax
from jax.experimental import pallas as pl
from jax.experimental.pallas import tpu as pltpu

HIDDEN = 32
LANES = 128  # TPU vreg lane width


def lstm_net_kernel(tok_ref, emb_ref, w_ref, u_ref, b_ref, wfc_ref, bfc_ref, out_ref):
    """Fused embedding gather + LSTM recurrence + final Linear in one kernel invocation.

    tok_ref : (T*Bp, 1) int32  time-major token ids (row t*Bp + b = token of batch row b, step t)
    emb_ref : (Vp, D)   bf16   embedding table, zero-padded to Vp rows
    w_ref   : (D, 4H)   bf16   input->gates weight
    u_ref   : (H, 4H)   bf16   hidden->gates weight
    b_ref   : (1, 4H)   f32    gates bias
    wfc_ref : (H, 128)  bf16   fc1 weight, zero-padded from (H, 2) to 128 lane-dense columns
    bfc_ref : (1, 128)  f32    fc1 bias, zero-padded
    out_ref : (Bp, 128) f32    lane-dense logits block; real logits live in rows [:B], cols [:2]
    """
    H = HIDDEN
    G = 4 * H
    Bp = out_ref.shape[0]
    TB = tok_ref.shape[0]
    T = TB // Bp
    Vp = emb_ref.shape[0]

    # ---- Fused embedding gather + input projection (both hoisted out of the recurrence).
    # embW[v] = emb_bf16[v] @ W_bf16 (f32 accumulation); tokens then select rows of embW via an
    # exact 0/1 one-hot matmul, so xw[r] == emb[tok[r]] @ W exactly (zero terms contribute 0.0).
    embW = jnp.dot(emb_ref[...], w_ref[...], preferred_element_type=jnp.float32)  # (Vp, 4H) f32
    vlane = lax.broadcasted_iota(jnp.int32, (TB, Vp), 1)
    one_hot = (vlane == tok_ref[...]).astype(jnp.float32)                          # (TB, Vp)
    xw = jnp.dot(one_hot, embW, preferred_element_type=jnp.float32) + b_ref[...]   # (TB, 4H) f32

    U = u_ref[...]  # (H, 4H) bf16, kept resident across the recurrence

    # Loop-invariant lane masks over the 4H = 128 gate lanes (g = tanh gate quarter).
    glane = lax.broadcasted_iota(jnp.int32, (Bp, G), 1)
    is_g = jnp.logical_and(glane >= 2 * H, glane < 3 * H)
    pre_scale = jnp.where(is_g, 1.0, 0.5).astype(jnp.float32)

    h = jnp.zeros((Bp, H), jnp.float32)
    c = jnp.zeros((Bp, H), jnp.float32)

    # ---- Fully unrolled recurrence (T is small and static): whole schedule visible to the
    # LLO scheduler, all xw slices static.
    for t in range(T):
        gates = xw[t * Bp:(t + 1) * Bp, :] + jnp.dot(
            h.astype(jnp.bfloat16), U, preferred_element_type=jnp.float32)         # (Bp, 4H) f32
        # Single EUP pass over all 128 gate lanes: sigmoid(x) = 0.5*(1 + tanh(x/2)),
        # g lanes keep plain tanh(x). Fixup is cheap VPU work off the EUP slot.
        y = jnp.tanh(gates * pre_scale)
        act = jnp.where(is_g, y, 0.5 * (y + 1.0))
        i_t = act[:, 0 * H:1 * H]
        f_t = act[:, 1 * H:2 * H]
        g_t = act[:, 2 * H:3 * H]
        o_t = act[:, 3 * H:4 * H]
        c = f_t * c + i_t * g_t
        h = o_t * jnp.tanh(c)

    # ---- Lane-dense fc1 on the last hidden state (bf16 operands, f32 accumulation).
    out_ref[...] = (
        jnp.dot(h.astype(jnp.bfloat16), wfc_ref[...], preferred_element_type=jnp.float32)
        + bfc_ref[...]
    )


def _net_forward_impl(tokens, params):
    """tokens: (B, T) int32; returns logits (B, 2) float32."""
    emb = params["emb"]      # (V, D)
    W = params["W"]          # (D, 4H)
    U = params["U"]          # (H, 4H)
    b = params["b"]          # (1, 4H)
    Wfc = params["Wfc"]      # (H, 2)
    bfc = params["bfc"]      # (1, 2)

    H = HIDDEN
    B, T = tokens.shape
    V, D = emb.shape

    Bp = max(8, pl.cdiv(B, 8) * 8)              # pad batch to full sublanes (unmasked stores)
    Vp = max(LANES, pl.cdiv(V, LANES) * LANES)  # pad vocab to full lanes for the one-hot gather

    # All glue below is inside jax.jit -> one fused XLA computation around the pallas_call.
    tok_pad = jnp.zeros((Bp, T), jnp.int32).at[:B, :].set(tokens.astype(jnp.int32))
    tok_tm = tok_pad.T.reshape(T * Bp, 1)                                      # time-major ids
    emb_pad = jnp.zeros((Vp, D), jnp.float32).at[:V, :].set(emb).astype(jnp.bfloat16)
    w_bf = W.astype(jnp.bfloat16)
    u_bf = U.astype(jnp.bfloat16)
    wfc_pad = jnp.zeros((H, LANES), jnp.float32).at[:, :2].set(Wfc).astype(jnp.bfloat16)
    bfc_pad = jnp.zeros((1, LANES), jnp.float32).at[:, :2].set(bfc)

    nbytes = lambda a: a.size * jnp.dtype(a.dtype).itemsize
    cost = pl.CostEstimate(
        flops=(2 * Vp * D * 4 * H              # emb @ W
               + 2 * (T * Bp) * Vp * 4 * H     # one-hot gather matmul
               + 2 * T * Bp * H * 4 * H        # recurrent h @ U
               + 2 * Bp * H * LANES),          # fc1
        transcendentals=T * Bp * (4 * H + H),
        bytes_accessed=(nbytes(tok_tm) + nbytes(emb_pad) + nbytes(w_bf) + nbytes(u_bf)
                        + nbytes(b) + nbytes(wfc_pad) + nbytes(bfc_pad) + Bp * LANES * 4),
    )

    out_padded = pl.pallas_call(
        lstm_net_kernel,
        out_shape=jax.ShapeDtypeStruct((Bp, LANES), jnp.float32),
        grid=(1,),
        in_specs=[
            pl.BlockSpec((T * Bp, 1), lambda i: (0, 0)),
            pl.BlockSpec((Vp, D), lambda i: (0, 0)),
            pl.BlockSpec((D, 4 * H), lambda i: (0, 0)),
            pl.BlockSpec((H, 4 * H), lambda i: (0, 0)),
            pl.BlockSpec((1, 4 * H), lambda i: (0, 0)),
            pl.BlockSpec((H, LANES), lambda i: (0, 0)),
            pl.BlockSpec((1, LANES), lambda i: (0, 0)),
        ],
        out_specs=pl.BlockSpec((Bp, LANES), lambda i: (0, 0)),
        compiler_params=pltpu.CompilerParams(dimension_semantics=("arbitrary",)),
        cost_estimate=cost,
    )(tok_tm, emb_pad, w_bf, u_bf, b, wfc_pad, bfc_pad)

    return out_padded[:B, :2]


net_forward = jax.jit(_net_forward_impl)


def net_forward_ref(tokens, params, mixed_precision=False):
    """Pure-JAX reference mirroring the PyTorch forward.

    mixed_precision=True mirrors the kernel's bf16-operand / f32-accumulation math (including
    the bf16 fc1 operands), so the kernel can be checked against it with a tight tolerance.
    """
    emb = params["emb"]
    W, U, b = params["W"], params["U"], params["b"]
    Wfc, bfc = params["Wfc"], params["bfc"]
    H = HIDDEN
    cast = (lambda a: a.astype(jnp.bfloat16)) if mixed_precision else (lambda a: a)

    x = emb[tokens].astype(jnp.float32)          # (B, T, D)
    Bsz, T, _ = x.shape
    Wc, Uc = cast(W), cast(U)
    h = jnp.zeros((Bsz, H), jnp.float32)
    c = jnp.zeros((Bsz, H), jnp.float32)
    for t in range(T):
        gates = (jnp.dot(cast(x[:, t, :]), Wc, preferred_element_type=jnp.float32)
                 + jnp.dot(cast(h), Uc, preferred_element_type=jnp.float32)
                 + b)
        i_t = jax.nn.sigmoid(gates[:, 0 * H:1 * H])
        f_t = jax.nn.sigmoid(gates[:, 1 * H:2 * H])
        g_t = jnp.tanh(gates[:, 2 * H:3 * H])
        o_t = jax.nn.sigmoid(gates[:, 3 * H:4 * H])
        c = f_t * c + i_t * g_t
        h = o_t * jnp.tanh(c)
    return jnp.dot(cast(h), cast(Wfc), preferred_element_type=jnp.float32) + bfc


def init_params(key, vocab_size, D=32, H=HIDDEN):
    k_emb, k_w, k_u, k_b, k_fw, k_fb = jax.random.split(key, 6)
    s = 1.0 / jnp.sqrt(H)
    return {
        # nn.Embedding default: N(0, 1)
        "emb": jax.random.normal(k_emb, (vocab_size, D), jnp.float32),
        # CustomLSTM init: U(-1/sqrt(H), 1/sqrt(H))
        "W": jax.random.uniform(k_w, (D, 4 * H), jnp.float32, -s, s),
        "U": jax.random.uniform(k_u, (H, 4 * H), jnp.float32, -s, s),
        "b": jax.random.uniform(k_b, (1, 4 * H), jnp.float32, -s, s),
        # nn.Linear(32, 2): weight (2, 32) stored transposed as (32, 2) for x @ W
        "Wfc": jax.random.uniform(k_fw, (H, 2), jnp.float32, -s, s),
        "bfc": jax.random.uniform(k_fb, (1, 2), jnp.float32, -s, s),
    }


if __name__ == "__main__":
    key = jax.random.PRNGKey(0)
    k_tok, k_par = jax.random.split(key)

    vocab_size = 50
    B, T = 2, 8
    tokens = jax.random.randint(k_tok, (B, T), 0, vocab_size, dtype=jnp.int32)
    params = init_params(k_par, vocab_size)

    logits = net_forward(tokens, params)
    jax.block_until_ready(logits)
    assert logits.shape == (B, 2)

    # Tight check vs a reference that mirrors the kernel's bf16-operand / f32-accum math
    # (the sigmoid-via-tanh rewrite only introduces sub-tolerance rounding differences).
    ref_mixed = net_forward_ref(tokens, params, mixed_precision=True)
    assert jnp.allclose(logits, ref_mixed, atol=2e-3, rtol=2e-3), (logits, ref_mixed)

    # Coarse sanity bound vs pure-f32 PyTorch-equivalent math (difference is only bf16 operand
    # rounding accumulated over the 8-step recurrence).
    ref_f32 = net_forward_ref(tokens, params, mixed_precision=False)
    assert jnp.allclose(logits, ref_f32, atol=1e-1, rtol=1e-1), (logits, ref_f32)

    print("KERNEL_OK")
</pallas_src>

<mosaic_0001>
module attributes {stable_mosaic.version = 11 : i64} {
  func.func @lstm_net_kernel(%arg0: i32, %arg1: memref<64x1xi32, #tpu.memory_space<vmem>>, %arg2: memref<128x32xbf16, #tpu.memory_space<vmem>>, %arg3: memref<32x128xbf16, #tpu.memory_space<vmem>>, %arg4: memref<32x128xbf16, #tpu.memory_space<vmem>>, %arg5: memref<1x128xf32, #tpu.memory_space<vmem>>, %arg6: memref<32x128xbf16, #tpu.memory_space<vmem>>, %arg7: memref<1x128xf32, #tpu.memory_space<vmem>>, %arg8: memref<8x128xf32, #tpu.memory_space<vmem>>) attributes {dimension_semantics = [#tpu.dimension_semantics<arbitrary>], iteration_bounds = array<i64: 1>, scalar_prefetch = 0 : i64, scratch_operands = 0 : i64, tpu.core_type = #tpu.core_type<tc>, window_params = [{pipeline_mode = #tpu.pipeline_mode<synchronous>, transform_indices = @transform_0, window_bounds = array<i64: 64, 1>}, {pipeline_mode = #tpu.pipeline_mode<synchronous>, transform_indices = @transform_1, window_bounds = array<i64: 128, 32>}, {pipeline_mode = #tpu.pipeline_mode<synchronous>, transform_indices = @transform_2, window_bounds = array<i64: 32, 128>}, {pipeline_mode = #tpu.pipeline_mode<synchronous>, transform_indices = @transform_3, window_bounds = array<i64: 32, 128>}, {pipeline_mode = #tpu.pipeline_mode<synchronous>, transform_indices = @transform_4, window_bounds = array<i64: 1, 128>}, {pipeline_mode = #tpu.pipeline_mode<synchronous>, transform_indices = @transform_5, window_bounds = array<i64: 32, 128>}, {pipeline_mode = #tpu.pipeline_mode<synchronous>, transform_indices = @transform_6, window_bounds = array<i64: 1, 128>}, {pipeline_mode = #tpu.pipeline_mode<synchronous>, transform_indices = @transform_7, window_bounds = array<i64: 8, 128>}]} {
    %c0 = arith.constant 0 : index
    %c0_0 = arith.constant 0 : index
    %0 = vector.load %arg2[%c0, %c0_0] : memref<128x32xbf16, #tpu.memory_space<vmem>>, vector<128x32xbf16>
    %c0_1 = arith.constant 0 : index
    %c0_2 = arith.constant 0 : index
    %1 = vector.load %arg3[%c0_1, %c0_2] : memref<32x128xbf16, #tpu.memory_space<vmem>>, vector<32x128xbf16>
    %cst = arith.constant dense<0.000000e+00> : vector<128x128xf32>
    %2 = tpu.matmul %0, %1, %cst {dimension_numbers = #tpu.dot_dimension_numbers<[1], [0], [0], [1], [0, 0, 1, 1], [], []>} : vector<128x32xbf16>, vector<32x128xbf16>, vector<128x128xf32> -> vector<128x128xf32>
    %3 = tpu.iota {dimensions = array<i32: 1>} : vector<64x128xi32>
    %c0_3 = arith.constant 0 : index
    %c0_4 = arith.constant 0 : index
    %4 = vector.load %arg1[%c0_3, %c0_4] : memref<64x1xi32, #tpu.memory_space<vmem>>, vector<64x1xi32>
    %5 = vector.broadcast %4 : vector<64x1xi32> to vector<64x128xi32>
    %6 = arith.cmpi eq, %3, %5 : vector<64x128xi32>
    %7 = arith.extui %6 : vector<64x128xi1> to vector<64x128xi32>
    %8 = arith.sitofp %7 : vector<64x128xi32> to vector<64x128xf32>
    %cst_5 = arith.constant dense<0.000000e+00> : vector<64x128xf32>
    %9 = tpu.matmul %8, %2, %cst_5 {dimension_numbers = #tpu.dot_dimension_numbers<[1], [0], [0], [1], [0, 0, 1, 1], [], []>} : vector<64x128xf32>, vector<128x128xf32>, vector<64x128xf32> -> vector<64x128xf32>
    %c0_6 = arith.constant 0 : index
    %c0_7 = arith.constant 0 : index
    %10 = vector.load %arg5[%c0_6, %c0_7] : memref<1x128xf32, #tpu.memory_space<vmem>>, vector<1x128xf32>
    %11 = vector.broadcast %10 : vector<1x128xf32> to vector<64x128xf32>
    %12 = arith.addf %9, %11 : vector<64x128xf32>
    %c0_8 = arith.constant 0 : index
    %c0_9 = arith.constant 0 : index
    %13 = vector.load %arg4[%c0_8, %c0_9] : memref<32x128xbf16, #tpu.memory_space<vmem>>, vector<32x128xbf16>
    %14 = tpu.iota {dimensions = array<i32: 1>} : vector<8x128xi32>
    %c64_i32 = arith.constant 64 : i32
    %15 = vector.broadcast %c64_i32 : i32 to vector<8x128xi32>
    %16 = arith.cmpi sge, %14, %15 : vector<8x128xi32>
    %c96_i32 = arith.constant 96 : i32
    %17 = vector.broadcast %c96_i32 : i32 to vector<8x128xi32>
    %18 = arith.cmpi slt, %14, %17 : vector<8x128xi32>
    %19 = arith.andi %16, %18 : vector<8x128xi1>
    %cst_10 = arith.constant 1.000000e+00 : f32
    %cst_11 = arith.constant 5.000000e-01 : f32
    %20 = vector.broadcast %cst_10 : f32 to vector<8x128xf32>
    %21 = vector.broadcast %cst_11 : f32 to vector<8x128xf32>
    %22 = arith.select %19, %20, %21 : vector<8x128xi1>, vector<8x128xf32>
    %cst_12 = arith.constant 0.000000e+00 : f32
    %23 = vector.broadcast %cst_12 : f32 to vector<8x32xf32>
    %cst_13 = arith.constant 0.000000e+00 : f32
    %24 = vector.broadcast %cst_13 : f32 to vector<8x32xf32>
    %25 = vector.extract_strided_slice %12 {offsets = [0, 0], sizes = [8, 128], strides = [1, 1]} : vector<64x128xf32> to vector<8x128xf32>
    %26 = arith.truncf %23 : vector<8x32xf32> to vector<8x32xbf16>
    %cst_14 = arith.constant dense<0.000000e+00> : vector<8x128xf32>
    %27 = tpu.matmul %26, %13, %cst_14 {dimension_numbers = #tpu.dot_dimension_numbers<[1], [0], [0], [1], [0, 0, 1, 1], [], []>} : vector<8x32xbf16>, vector<32x128xbf16>, vector<8x128xf32> -> vector<8x128xf32>
    %28 = arith.addf %25, %27 : vector<8x128xf32>
    %29 = arith.mulf %28, %22 : vector<8x128xf32>
    %30 = math.tanh %29 : vector<8x128xf32>
    %cst_15 = arith.constant 1.000000e+00 : f32
    %31 = vector.broadcast %cst_15 : f32 to vector<8x128xf32>
    %32 = arith.addf %30, %31 : vector<8x128xf32>
    %cst_16 = arith.constant 5.000000e-01 : f32
    %33 = vector.broadcast %cst_16 : f32 to vector<8x128xf32>
    %34 = arith.mulf %33, %32 : vector<8x128xf32>
    %35 = arith.select %19, %30, %34 : vector<8x128xi1>, vector<8x128xf32>
    %36 = vector.extract_strided_slice %35 {offsets = [0, 0], sizes = [8, 32], strides = [1, 1]} : vector<8x128xf32> to vector<8x32xf32>
    %37 = vector.extract_strided_slice %35 {offsets = [0, 32], sizes = [8, 32], strides = [1, 1]} : vector<8x128xf32> to vector<8x32xf32>
    %38 = vector.extract_strided_slice %35 {offsets = [0, 64], sizes = [8, 32], strides = [1, 1]} : vector<8x128xf32> to vector<8x32xf32>
    %39 = vector.extract_strided_slice %35 {offsets = [0, 96], sizes = [8, 32], strides = [1, 1]} : vector<8x128xf32> to vector<8x32xf32>
    %40 = arith.mulf %37, %24 : vector<8x32xf32>
    %41 = arith.mulf %36, %38 : vector<8x32xf32>
    %42 = arith.addf %40, %41 : vector<8x32xf32>
    %43 = math.tanh %42 : vector<8x32xf32>
    %44 = arith.mulf %39, %43 : vector<8x32xf32>
    %45 = vector.extract_strided_slice %12 {offsets = [8, 0], sizes = [8, 128], strides = [1, 1]} : vector<64x128xf32> to vector<8x128xf32>
    %46 = arith.truncf %44 : vector<8x32xf32> to vector<8x32xbf16>
    %cst_17 = arith.constant dense<0.000000e+00> : vector<8x128xf32>
    %47 = tpu.matmul %46, %13, %cst_17 {dimension_numbers = #tpu.dot_dimension_numbers<[1], [0], [0], [1], [0, 0, 1, 1], [], []>} : vector<8x32xbf16>, vector<32x128xbf16>, vector<8x128xf32> -> vector<8x128xf32>
    %48 = arith.addf %45, %47 : vector<8x128xf32>
    %49 = arith.mulf %48, %22 : vector<8x128xf32>
    %50 = math.tanh %49 : vector<8x128xf32>
    %cst_18 = arith.constant 1.000000e+00 : f32
    %51 = vector.broadcast %cst_18 : f32 to vector<8x128xf32>
    %52 = arith.addf %50, %51 : vector<8x128xf32>
    %cst_19 = arith.constant 5.000000e-01 : f32
    %53 = vector.broadcast %cst_19 : f32 to vector<8x128xf32>
    %54 = arith.mulf %53, %52 : vector<8x128xf32>
    %55 = arith.select %19, %50, %54 : vector<8x128xi1>, vector<8x128xf32>
    %56 = vector.extract_strided_slice %55 {offsets = [0, 0], sizes = [8, 32], strides = [1, 1]} : vector<8x128xf32> to vector<8x32xf32>
    %57 = vector.extract_strided_slice %55 {offsets = [0, 32], sizes = [8, 32], strides = [1, 1]} : vector<8x128xf32> to vector<8x32xf32>
    %58 = vector.extract_strided_slice %55 {offsets = [0, 64], sizes = [8, 32], strides = [1, 1]} : vector<8x128xf32> to vector<8x32xf32>
    %59 = vector.extract_strided_slice %55 {offsets = [0, 96], sizes = [8, 32], strides = [1, 1]} : vector<8x128xf32> to vector<8x32xf32>
    %60 = arith.mulf %57, %42 : vector<8x32xf32>
    %61 = arith.mulf %56, %58 : vector<8x32xf32>
    %62 = arith.addf %60, %61 : vector<8x32xf32>
    %63 = math.tanh %62 : vector<8x32xf32>
    %64 = arith.mulf %59, %63 : vector<8x32xf32>
    %65 = vector.extract_strided_slice %12 {offsets = [16, 0], sizes = [8, 128], strides = [1, 1]} : vector<64x128xf32> to vector<8x128xf32>
    %66 = arith.truncf %64 : vector<8x32xf32> to vector<8x32xbf16>
    %cst_20 = arith.constant dense<0.000000e+00> : vector<8x128xf32>
    %67 = tpu.matmul %66, %13, %cst_20 {dimension_numbers = #tpu.dot_dimension_numbers<[1], [0], [0], [1], [0, 0, 1, 1], [], []>} : vector<8x32xbf16>, vector<32x128xbf16>, vector<8x128xf32> -> vector<8x128xf32>
    %68 = arith.addf %65, %67 : vector<8x128xf32>
    %69 = arith.mulf %68, %22 : vector<8x128xf32>
    %70 = math.tanh %69 : vector<8x128xf32>
    %cst_21 = arith.constant 1.000000e+00 : f32
    %71 = vector.broadcast %cst_21 : f32 to vector<8x128xf32>
    %72 = arith.addf %70, %71 : vector<8x128xf32>
    %cst_22 = arith.constant 5.000000e-01 : f32
    %73 = vector.broadcast %cst_22 : f32 to vector<8x128xf32>
    %74 = arith.mulf %73, %72 : vector<8x128xf32>
    %75 = arith.select %19, %70, %74 : vector<8x128xi1>, vector<8x128xf32>
    %76 = vector.extract_strided_slice %75 {offsets = [0, 0], sizes = [8, 32], strides = [1, 1]} : vector<8x128xf32> to vector<8x32xf32>
    %77 = vector.extract_strided_slice %75 {offsets = [0, 32], sizes = [8, 32], strides = [1, 1]} : vector<8x128xf32> to vector<8x32xf32>
    %78 = vector.extract_strided_slice %75 {offsets = [0, 64], sizes = [8, 32], strides = [1, 1]} : vector<8x128xf32> to vector<8x32xf32>
    %79 = vector.extract_strided_slice %75 {offsets = [0, 96], sizes = [8, 32], strides = [1, 1]} : vector<8x128xf32> to vector<8x32xf32>
    %80 = arith.mulf %77, %62 : vector<8x32xf32>
    %81 = arith.mulf %76, %78 : vector<8x32xf32>
    %82 = arith.addf %80, %81 : vector<8x32xf32>
    %83 = math.tanh %82 : vector<8x32xf32>
    %84 = arith.mulf %79, %83 : vector<8x32xf32>
    %85 = vector.extract_strided_slice %12 {offsets = [24, 0], sizes = [8, 128], strides = [1, 1]} : vector<64x128xf32> to vector<8x128xf32>
    %86 = arith.truncf %84 : vector<8x32xf32> to vector<8x32xbf16>
    %cst_23 = arith.constant dense<0.000000e+00> : vector<8x128xf32>
    %87 = tpu.matmul %86, %13, %cst_23 {dimension_numbers = #tpu.dot_dimension_numbers<[1], [0], [0], [1], [0, 0, 1, 1], [], []>} : vector<8x32xbf16>, vector<32x128xbf16>, vector<8x128xf32> -> vector<8x128xf32>
    %88 = arith.addf %85, %87 : vector<8x128xf32>
    %89 = arith.mulf %88, %22 : vector<8x128xf32>
    %90 = math.tanh %89 : vector<8x128xf32>
    %cst_24 = arith.constant 1.000000e+00 : f32
    %91 = vector.broadcast %cst_24 : f32 to vector<8x128xf32>
    %92 = arith.addf %90, %91 : vector<8x128xf32>
    %cst_25 = arith.constant 5.000000e-01 : f32
    %93 = vector.broadcast %cst_25 : f32 to vector<8x128xf32>
    %94 = arith.mulf %93, %92 : vector<8x128xf32>
    %95 = arith.select %19, %90, %94 : vector<8x128xi1>, vector<8x128xf32>
    %96 = vector.extract_strided_slice %95 {offsets = [0, 0], sizes = [8, 32], strides = [1, 1]} : vector<8x128xf32> to vector<8x32xf32>
    %97 = vector.extract_strided_slice %95 {offsets = [0, 32], sizes = [8, 32], strides = [1, 1]} : vector<8x128xf32> to vector<8x32xf32>
    %98 = vector.extract_strided_slice %95 {offsets = [0, 64], sizes = [8, 32], strides = [1, 1]} : vector<8x128xf32> to vector<8x32xf32>
    %99 = vector.extract_strided_slice %95 {offsets = [0, 96], sizes = [8, 32], strides = [1, 1]} : vector<8x128xf32> to vector<8x32xf32>
    %100 = arith.mulf %97, %82 : vector<8x32xf32>
    %101 = arith.mulf %96, %98 : vector<8x32xf32>
    %102 = arith.addf %100, %101 : vector<8x32xf32>
    %103 = math.tanh %102 : vector<8x32xf32>
    %104 = arith.mulf %99, %103 : vector<8x32xf32>
    %105 = vector.extract_strided_slice %12 {offsets = [32, 0], sizes = [8, 128], strides = [1, 1]} : vector<64x128xf32> to vector<8x128xf32>
    %106 = arith.truncf %104 : vector<8x32xf32> to vector<8x32xbf16>
    %cst_26 = arith.constant dense<0.000000e+00> : vector<8x128xf32>
    %107 = tpu.matmul %106, %13, %cst_26 {dimension_numbers = #tpu.dot_dimension_numbers<[1], [0], [0], [1], [0, 0, 1, 1], [], []>} : vector<8x32xbf16>, vector<32x128xbf16>, vector<8x128xf32> -> vector<8x128xf32>
    %108 = arith.addf %105, %107 : vector<8x128xf32>
    %109 = arith.mulf %108, %22 : vector<8x128xf32>
    %110 = math.tanh %109 : vector<8x128xf32>
    %cst_27 = arith.constant 1.000000e+00 : f32
    %111 = vector.broadcast %cst_27 : f32 to vector<8x128xf32>
    %112 = arith.addf %110, %111 : vector<8x128xf32>
    %cst_28 = arith.constant 5.000000e-01 : f32
    %113 = vector.broadcast %cst_28 : f32 to vector<8x128xf32>
    %114 = arith.mulf %113, %112 : vector<8x128xf32>
    %115 = arith.select %19, %110, %114 : vector<8x128xi1>, vector<8x128xf32>
    %116 = vector.extract_strided_slice %115 {offsets = [0, 0], sizes = [8, 32], strides = [1, 1]} : vector<8x128xf32> to vector<8x32xf32>
    %117 = vector.extract_strided_slice %115 {offsets = [0, 32], sizes = [8, 32], strides = [1, 1]} : vector<8x128xf32> to vector<8x32xf32>
    %118 = vector.extract_strided_slice %115 {offsets = [0, 64], sizes = [8, 32], strides = [1, 1]} : vector<8x128xf32> to vector<8x32xf32>
    %119 = vector.extract_strided_slice %115 {offsets = [0, 96], sizes = [8, 32], strides = [1, 1]} : vector<8x128xf32> to vector<8x32xf32>
    %120 = arith.mulf %117, %102 : vector<8x32xf32>
    %121 = arith.mulf %116, %118 : vector<8x32xf32>
    %122 = arith.addf %120, %121 : vector<8x32xf32>
    %123 = math.tanh %122 : vector<8x32xf32>
    %124 = arith.mulf %119, %123 : vector<8x32xf32>
    %125 = vector.extract_strided_slice %12 {offsets = [40, 0], sizes = [8, 128], strides = [1, 1]} : vector<64x128xf32> to vector<8x128xf32>
    %126 = arith.truncf %124 : vector<8x32xf32> to vector<8x32xbf16>
    %cst_29 = arith.constant dense<0.000000e+00> : vector<8x128xf32>
    %127 = tpu.matmul %126, %13, %cst_29 {dimension_numbers = #tpu.dot_dimension_numbers<[1], [0], [0], [1], [0, 0, 1, 1], [], []>} : vector<8x32xbf16>, vector<32x128xbf16>, vector<8x128xf32> -> vector<8x128xf32>
    %128 = arith.addf %125, %127 : vector<8x128xf32>
    %129 = arith.mulf %128, %22 : vector<8x128xf32>
    %130 = math.tanh %129 : vector<8x128xf32>
    %cst_30 = arith.constant 1.000000e+00 : f32
    %131 = vector.broadcast %cst_30 : f32 to vector<8x128xf32>
    %132 = arith.addf %130, %131 : vector<8x128xf32>
    %cst_31 = arith.constant 5.000000e-01 : f32
    %133 = vector.broadcast %cst_31 : f32 to vector<8x128xf32>
    %134 = arith.mulf %133, %132 : vector<8x128xf32>
    %135 = arith.select %19, %130, %134 : vector<8x128xi1>, vector<8x128xf32>
    %136 = vector.extract_strided_slice %135 {offsets = [0, 0], sizes = [8, 32], strides = [1, 1]} : vector<8x128xf32> to vector<8x32xf32>
    %137 = vector.extract_strided_slice %135 {offsets = [0, 32], sizes = [8, 32], strides = [1, 1]} : vector<8x128xf32> to vector<8x32xf32>
    %138 = vector.extract_strided_slice %135 {offsets = [0, 64], sizes = [8, 32], strides = [1, 1]} : vector<8x128xf32> to vector<8x32xf32>
    %139 = vector.extract_strided_slice %135 {offsets = [0, 96], sizes = [8, 32], strides = [1, 1]} : vector<8x128xf32> to vector<8x32xf32>
    %140 = arith.mulf %137, %122 : vector<8x32xf32>
    %141 = arith.mulf %136, %138 : vector<8x32xf32>
    %142 = arith.addf %140, %141 : vector<8x32xf32>
    %143 = math.tanh %142 : vector<8x32xf32>
    %144 = arith.mulf %139, %143 : vector<8x32xf32>
    %145 = vector.extract_strided_slice %12 {offsets = [48, 0], sizes = [8, 128], strides = [1, 1]} : vector<64x128xf32> to vector<8x128xf32>
    %146 = arith.truncf %144 : vector<8x32xf32> to vector<8x32xbf16>
    %cst_32 = arith.constant dense<0.000000e+00> : vector<8x128xf32>
    %147 = tpu.matmul %146, %13, %cst_32 {dimension_numbers = #tpu.dot_dimension_numbers<[1], [0], [0], [1], [0, 0, 1, 1], [], []>} : vector<8x32xbf16>, vector<32x128xbf16>, vector<8x128xf32> -> vector<8x128xf32>
    %148 = arith.addf %145, %147 : vector<8x128xf32>
    %149 = arith.mulf %148, %22 : vector<8x128xf32>
    %150 = math.tanh %149 : vector<8x128xf32>
    %cst_33 = arith.constant 1.000000e+00 : f32
    %151 = vector.broadcast %cst_33 : f32 to vector<8x128xf32>
    %152 = arith.addf %150, %151 : vector<8x128xf32>
    %cst_34 = arith.constant 5.000000e-01 : f32
    %153 = vector.broadcast %cst_34 : f32 to vector<8x128xf32>
    %154 = arith.mulf %153, %152 : vector<8x128xf32>
    %155 = arith.select %19, %150, %154 : vector<8x128xi1>, vector<8x128xf32>
    %156 = vector.extract_strided_slice %155 {offsets = [0, 0], sizes = [8, 32], strides = [1, 1]} : vector<8x128xf32> to vector<8x32xf32>
    %157 = vector.extract_strided_slice %155 {offsets = [0, 32], sizes = [8, 32], strides = [1, 1]} : vector<8x128xf32> to vector<8x32xf32>
    %158 = vector.extract_strided_slice %155 {offsets = [0, 64], sizes = [8, 32], strides = [1, 1]} : vector<8x128xf32> to vector<8x32xf32>
    %159 = vector.extract_strided_slice %155 {offsets = [0, 96], sizes = [8, 32], strides = [1, 1]} : vector<8x128xf32> to vector<8x32xf32>
    %160 = arith.mulf %157, %142 : vector<8x32xf32>
    %161 = arith.mulf %156, %158 : vector<8x32xf32>
    %162 = arith.addf %160, %161 : vector<8x32xf32>
    %163 = math.tanh %162 : vector<8x32xf32>
    %164 = arith.mulf %159, %163 : vector<8x32xf32>
    %165 = vector.extract_strided_slice %12 {offsets = [56, 0], sizes = [8, 128], strides = [1, 1]} : vector<64x128xf32> to vector<8x128xf32>
    %166 = arith.truncf %164 : vector<8x32xf32> to vector<8x32xbf16>
    %cst_35 = arith.constant dense<0.000000e+00> : vector<8x128xf32>
    %167 = tpu.matmul %166, %13, %cst_35 {dimension_numbers = #tpu.dot_dimension_numbers<[1], [0], [0], [1], [0, 0, 1, 1], [], []>} : vector<8x32xbf16>, vector<32x128xbf16>, vector<8x128xf32> -> vector<8x128xf32>
    %168 = arith.addf %165, %167 : vector<8x128xf32>
    %169 = arith.mulf %168, %22 : vector<8x128xf32>
    %170 = math.tanh %169 : vector<8x128xf32>
    %cst_36 = arith.constant 1.000000e+00 : f32
    %171 = vector.broadcast %cst_36 : f32 to vector<8x128xf32>
    %172 = arith.addf %170, %171 : vector<8x128xf32>
    %cst_37 = arith.constant 5.000000e-01 : f32
    %173 = vector.broadcast %cst_37 : f32 to vector<8x128xf32>
    %174 = arith.mulf %173, %172 : vector<8x128xf32>
    %175 = arith.select %19, %170, %174 : vector<8x128xi1>, vector<8x128xf32>
    %176 = vector.extract_strided_slice %175 {offsets = [0, 0], sizes = [8, 32], strides = [1, 1]} : vector<8x128xf32> to vector<8x32xf32>
    %177 = vector.extract_strided_slice %175 {offsets = [0, 32], sizes = [8, 32], strides = [1, 1]} : vector<8x128xf32> to vector<8x32xf32>
    %178 = vector.extract_strided_slice %175 {offsets = [0, 64], sizes = [8, 32], strides = [1, 1]} : vector<8x128xf32> to vector<8x32xf32>
    %179 = vector.extract_strided_slice %175 {offsets = [0, 96], sizes = [8, 32], strides = [1, 1]} : vector<8x128xf32> to vector<8x32xf32>
    %180 = arith.mulf %177, %162 : vector<8x32xf32>
    %181 = arith.mulf %176, %178 : vector<8x32xf32>
    %182 = arith.addf %180, %181 : vector<8x32xf32>
    %183 = math.tanh %182 : vector<8x32xf32>
    %184 = arith.mulf %179, %183 : vector<8x32xf32>
    %185 = arith.truncf %184 : vector<8x32xf32> to vector<8x32xbf16>
    %c0_38 = arith.constant 0 : index
    %c0_39 = arith.constant 0 : index
    %186 = vector.load %arg6[%c0_38, %c0_39] : memref<32x128xbf16, #tpu.memory_space<vmem>>, vector<32x128xbf16>
    %cst_40 = arith.constant dense<0.000000e+00> : vector<8x128xf32>
    %187 = tpu.matmul %185, %186, %cst_40 {dimension_numbers = #tpu.dot_dimension_numbers<[1], [0], [0], [1], [0, 0, 1, 1], [], []>} : vector<8x32xbf16>, vector<32x128xbf16>, vector<8x128xf32> -> vector<8x128xf32>
    %c0_41 = arith.constant 0 : index
    %c0_42 = arith.constant 0 : index
    %188 = vector.load %arg7[%c0_41, %c0_42] : memref<1x128xf32, #tpu.memory_space<vmem>>, vector<1x128xf32>
    %189 = vector.broadcast %188 : vector<1x128xf32> to vector<8x128xf32>
    %190 = arith.addf %187, %189 : vector<8x128xf32>
    %c0_43 = arith.constant 0 : index
    %c0_44 = arith.constant 0 : index
    %191 = vector.load %arg8[%c0_43, %c0_44] : memref<8x128xf32, #tpu.memory_space<vmem>>, vector<8x128xf32>
    tpu.vector_store %arg8[%c0_43, %c0_44], %190 {strides = array<i32>} : memref<8x128xf32, #tpu.memory_space<vmem>>, vector<8x128xf32>,
    return
  }
  func.func @transform_0(%arg0: i32) -> (i32, i32) {
    %c0_i32 = arith.constant 0 : i32
    %c0_i32_0 = arith.constant 0 : i32
    %c0_i32_1 = arith.constant 0 : i32
    return %c0_i32, %c0_i32_0 : i32, i32
  }
  func.func @transform_1(%arg0: i32) -> (i32, i32) {
    %c0_i32 = arith.constant 0 : i32
    %c0_i32_0 = arith.constant 0 : i32
    %c0_i32_1 = arith.constant 0 : i32
    return %c0_i32, %c0_i32_0 : i32, i32
  }
  func.func @transform_2(%arg0: i32) -> (i32, i32) {
    %c0_i32 = arith.constant 0 : i32
    %c0_i32_0 = arith.constant 0 : i32
    %c0_i32_1 = arith.constant 0 : i32
    return %c0_i32, %c0_i32_0 : i32, i32
  }
  func.func @transform_3(%arg0: i32) -> (i32, i32) {
    %c0_i32 = arith.constant 0 : i32
    %c0_i32_0 = arith.constant 0 : i32
    %c0_i32_1 = arith.constant 0 : i32
    return %c0_i32, %c0_i32_0 : i32, i32
  }
  func.func @transform_4(%arg0: i32) -> (i32, i32) {
    %c0_i32 = arith.constant 0 : i32
    %c0_i32_0 = arith.constant 0 : i32
    %c0_i32_1 = arith.constant 0 : i32
    return %c0_i32, %c0_i32_0 : i32, i32
  }
  func.func @transform_5(%arg0: i32) -> (i32, i32) {
    %c0_i32 = arith.constant 0 : i32
    %c0_i32_0 = arith.constant 0 : i32
    %c0_i32_1 = arith.constant 0 : i32
    return %c0_i32, %c0_i32_0 : i32, i32
  }
  func.func @transform_6(%arg0: i32) -> (i32, i32) {
    %c0_i32 = arith.constant 0 : i32
    %c0_i32_0 = arith.constant 0 : i32
    %c0_i32_1 = arith.constant 0 : i32
    return %c0_i32, %c0_i32_0 : i32, i32
  }
  func.func @transform_7(%arg0: i32) -> (i32, i32) {
    %c0_i32 = arith.constant 0 : i32
    %c0_i32_0 = arith.constant 0 : i32
    %c0_i32_1 = arith.constant 0 : i32
    return %c0_i32, %c0_i32_0 : i32, i32
  }
}

</mosaic_0001>

<llo_original>
// kernel: _net_forward_impl.1
$region0: #{_net_forward_impl.1}
  #allocation0 [shape = 'u32[]', space=smem, size = 0x4, offset = 0x4, fixed_abs, tag = 'smem constant byte address 0x4 - core index']
  #allocation1 [shape = 'u32[144,128]{1,0:T(1,128)}', space=vmem, size = 0x12000, scoped, tag = 'internal scratch']
  %s0 = inlined_call_operand.vmem [shape: s32[64,1], index: 0, kind: input, shape index: {}]
  %s1 = inlined_call_operand.vmem [shape: bf16[128,32], index: 1, kind: input, shape index: {}]
  %s2 = inlined_call_operand.vmem [shape: bf16[32,128], index: 2, kind: input, shape index: {}]
  %s3 = inlined_call_operand.vmem [shape: bf16[32,128], index: 3, kind: input, shape index: {}]
  %s4 = inlined_call_operand.vmem [shape: f32[1,128], index: 4, kind: input, shape index: {}]
  %s5 = inlined_call_operand.vmem [shape: bf16[32,128], index: 5, kind: input, shape index: {}]
  %s6 = inlined_call_operand.vmem [shape: f32[1,128], index: 6, kind: input, shape index: {}]
  %s7 = inlined_call_operand.vmem [shape: f32[8,128], index: 7, kind: output, shape index: {}]
  %s8 = sld [smem:[#allocation0]]
  $region38: #{_net_forward_impl.1} parent=0
    _
  %s10 = ssub.s32 1, %s8
  %s11 = scalar_select 0, %s10, %s8
  // Predicated region
  $region2: #{_net_forward_impl.1} parent=0 // pred_check
    _
  $region3: #{_net_forward_impl.1} parent=0 // pred_check_branch
    %13 = sbr.rel (0) target = $region5
  $region4: #{_net_forward_impl.1} parent=0 // pred_region
    _
  $region5: #{_net_forward_impl.1} parent=0 // pred_fallthru
    _
  // Predicated region
  $region6: #{_net_forward_impl.1} parent=0 // pred_check
    _
  $region7: #{_net_forward_impl.1} parent=0 // pred_check_branch
    %15 = sbr.rel (0) target = $region9
  $region8: #{_net_forward_impl.1} parent=0 // pred_region
    _
  $region9: #{_net_forward_impl.1} parent=0 // pred_fallthru
    _
  // Predicated region
  $region10: #{_net_forward_impl.1} parent=0 // pred_check
    _
  $region11: #{_net_forward_impl.1} parent=0 // pred_check_branch
    %17 = sbr.rel (0) target = $region13
  $region12: #{_net_forward_impl.1} parent=0 // pred_region
    _
  $region13: #{_net_forward_impl.1} parent=0 // pred_fallthru
    _
  // Predicated region
  $region14: #{_net_forward_impl.1} parent=0 // pred_check
    _
  $region15: #{_net_forward_impl.1} parent=0 // pred_check_branch
    %19 = sbr.rel (0) target = $region17
  $region16: #{_net_forward_impl.1} parent=0 // pred_region
    _
  $region17: #{_net_forward_impl.1} parent=0 // pred_fallthru
    _
  // Predicated region
  $region18: #{_net_forward_impl.1} parent=0 // pred_check
    _
  $region19: #{_net_forward_impl.1} parent=0 // pred_check_branch
    %21 = sbr.rel (0) target = $region21
  $region20: #{_net_forward_impl.1} parent=0 // pred_region
    _
  $region21: #{_net_forward_impl.1} parent=0 // pred_fallthru
    _
  // Predicated region
  $region22: #{_net_forward_impl.1} parent=0 // pred_check
    _
  $region23: #{_net_forward_impl.1} parent=0 // pred_check_branch
    %23 = sbr.rel (0) target = $region25
  $region24: #{_net_forward_impl.1} parent=0 // pred_region
    _
  $region25: #{_net_forward_impl.1} parent=0 // pred_fallthru
    _
  // Predicated region
  $region26: #{_net_forward_impl.1} parent=0 // pred_check
    _
  $region27: #{_net_forward_impl.1} parent=0 // pred_check_branch
    %25 = sbr.rel (0) target = $region29
  $region28: #{_net_forward_impl.1} parent=0 // pred_region
    _
  $region29: #{_net_forward_impl.1} parent=0 // pred_fallthru
    _
  %v27 = vld [vmem:[%s1] sm:$0xf]
  %v28 = vld [vmem:[%s1 + $0x4] sm:$0xf]
  %v29 = vld [vmem:[%s1 + $0x8] sm:$0xf]
  %v30 = vld [vmem:[%s1 + $0xc] sm:$0xf]
  %v31 = vld [vmem:[%s1 + $0x10] sm:$0xf]
  %v32 = vld [vmem:[%s1 + $0x14] sm:$0xf]
  %v33 = vld [vmem:[%s1 + $0x18] sm:$0xf]
  %v34 = vld [vmem:[%s1 + $0x1c] sm:$0xf]
  %v35 = vld [vmem:[%s1 + $0x20] sm:$0xf]
  %v36 = vld [vmem:[%s1 + $0x24] sm:$0xf]
  %v37 = vld [vmem:[%s1 + $0x28] sm:$0xf]
  %v38 = vld [vmem:[%s1 + $0x2c] sm:$0xf]
  %v39 = vld [vmem:[%s1 + $0x30] sm:$0xf]
  %v40 = vld [vmem:[%s1 + $0x34] sm:$0xf]
  %v41 = vld [vmem:[%s1 + $0x38] sm:$0xf]
  %v42 = vld [vmem:[%s1 + $0x3c] sm:$0xf]
  %v43 = vld [vmem:[%s2] sm:$0xf]
  %v44 = vld [vmem:[%s2 + $0x4] sm:$0xf]
  %v45 = vld [vmem:[%s2 + $0x8] sm:$0xf]
  %v46 = vld [vmem:[%s2 + $0xc] sm:$0xf]
  %v63 = vunpack.c.l.b16 %v27
  %v64 = vunpack.c.l.b16 %v28
  %v65 = vunpack.c.l.b16 %v29
  %v66 = vunpack.c.l.b16 %v30
  %v67 = vunpack.c.l.b16 %v31
  %v68 = vunpack.c.l.b16 %v32
  %v69 = vunpack.c.l.b16 %v33
  %v70 = vunpack.c.l.b16 %v34
  %v71 = vunpack.c.l.b16 %v35
  %v72 = vunpack.c.l.b16 %v36
  %v73 = vunpack.c.l.b16 %v37
  %v74 = vunpack.c.l.b16 %v38
  %v75 = vunpack.c.l.b16 %v39
  %v76 = vunpack.c.l.b16 %v40
  %v77 = vunpack.c.l.b16 %v41
  %v78 = vunpack.c.l.b16 %v42
  %v79 = vpack.c.b16 %v64, %v63
  %v80 = vpack.c.b16 %v66, %v65
  %v81 = vpack.c.b16 %v68, %v67
  %v82 = vpack.c.b16 %v70, %v69
  %v83 = vpack.c.b16 %v72, %v71
  %v84 = vpack.c.b16 %v74, %v73
  %v85 = vpack.c.b16 %v76, %v75
  %v86 = vpack.c.b16 %v78, %v77
  %v91 = vunpack.c.l.b16 %v43
  %v92 = vunpack.c.l.b16 %v44
  %v93 = vunpack.c.l.b16 %v45
  %v94 = vunpack.c.l.b16 %v46
  %v95 = vpack.c.b16 %v92, %v91
  %v96 = vpack.c.b16 %v94, %v93
  %vm99 = vcmask 261120
  %v101 = vsel %vm99, %v79, 0
  %v104 = vsel %vm99, %v80, 0
  %v107 = vsel %vm99, %v81, 0
  %v110 = vsel %vm99, %v82, 0
  %v113 = vsel %vm99, %v83, 0
  %v116 = vsel %vm99, %v84, 0
  %v119 = vsel %vm99, %v85, 0
  %v122 = vsel %vm99, %v86, 0
  %124 = vmatprep.subr.bf16.mxu0 0
  %125 = vmatpush1.bf16.msra.mxu0 %v95
  %126 = vmatprep.subr.bf16.mxu0 0
  %127 = vmatpush1.bf16.msra.mxu0 %v96
  %128 = vmatprep.subr.bf16.mxu0 0
  %129 = vmatpush1.bf16.msra.mxu0 0
  %130 = vmatprep.subr.bf16.mxu0 0
  %131 = vmatpush1.bf16.msra.mxu0 0
  %132 = vmatprep.subr.bf16.mxu0 0
  %133 = vmatpush1.bf16.msra.mxu0 0
  %134 = vmatprep.subr.bf16.mxu0 0
  %135 = vmatpush1.bf16.msra.mxu0 0
  %136 = vmatprep.subr.bf16.mxu0 0
  %137 = vmatpush1.bf16.msra.mxu0 0
  %138 = vmatprep.subr.bf16.mxu0 0
  %139 = vmatpush1.bf16.msra.mxu0 0
  %140 = vmatprep.subr.bf16.mxu0 0
  %141 = vmatpush1.bf16.msra.mxu0 0
  %142 = vmatprep.subr.bf16.mxu0 0
  %143 = vmatpush1.bf16.msra.mxu0 0
  %144 = vmatprep.subr.bf16.mxu0 0
  %145 = vmatpush1.bf16.msra.mxu0 0
  %146 = vmatprep.subr.bf16.mxu0 0
  %147 = vmatpush1.bf16.msra.mxu0 0
  %148 = vmatprep.subr.bf16.mxu0 0
  %149 = vmatpush1.bf16.msra.mxu0 0
  %150 = vmatprep.subr.bf16.mxu0 0
  %151 = vmatpush1.bf16.msra.mxu0 0
  %152 = vmatprep.subr.bf16.mxu0 0
  %153 = vmatpush1.bf16.msra.mxu0 0
  %154 = vmatprep.subr.bf16.mxu0 0
  %155 = vmatpush1.bf16.msra.mxu0 0
  %156 = vmatprep.mubr.bf16.mxu0 0
  %157 = vmatmul.mubr.bf16.gmra.mrb[0].mxu0 %v101
  %v158 = vpop.f32.mrb[0].mxu0
  %v159 = vadd.f32 0.0, %v158
  %v160 = vpop.f32.mrb[0].mxu0
  %v161 = vpop.f32.mrb[0].mxu0
  %v162 = vadd.f32 0.0, %v161
  %v163 = vpop.f32.mrb[0].mxu0
  %164 = vmatprep.mubr.bf16.mxu0 0
  %165 = vmatmul.mubr.bf16.gmra.mrb[0].mxu0 %v104
  %v166 = vpop.f32.mrb[0].mxu0
  %v167 = vadd.f32 0.0, %v166
  %v168 = vpop.f32.mrb[0].mxu0
  %v169 = vpop.f32.mrb[0].mxu0
  %v170 = vadd.f32 0.0, %v169
  %v171 = vpop.f32.mrb[0].mxu0
  %172 = vmatprep.mubr.bf16.mxu0 0
  %173 = vmatmul.mubr.bf16.gmra.mrb[0].mxu0 %v107
  %v174 = vpop.f32.mrb[0].mxu0
  %v175 = vadd.f32 0.0, %v174
  %v176 = vpop.f32.mrb[0].mxu0
  %v177 = vpop.f32.mrb[0].mxu0
  %v178 = vadd.f32 0.0, %v177
  %v179 = vpop.f32.mrb[0].mxu0
  %180 = vmatprep.mubr.bf16.mxu0 0
  %181 = vmatmul.mubr.bf16.gmra.mrb[0].mxu0 %v110
  %v182 = vpop.f32.mrb[0].mxu0
  %v183 = vadd.f32 0.0, %v182
  %v184 = vpop.f32.mrb[0].mxu0
  %v185 = vpop.f32.mrb[0].mxu0
  %v186 = vadd.f32 0.0, %v185
  %v187 = vpop.f32.mrb[0].mxu0
  %188 = vmatprep.mubr.bf16.mxu0 0
  %189 = vmatmul.mubr.bf16.gmra.mrb[0].mxu0 %v113
  %v190 = vpop.f32.mrb[0].mxu0
  %v191 = vadd.f32 0.0, %v190
  %v192 = vpop.f32.mrb[0].mxu0
  %v193 = vpop.f32.mrb[0].mxu0
  %v194 = vadd.f32 0.0, %v193
  %v195 = vpop.f32.mrb[0].mxu0
  %196 = vmatprep.mubr.bf16.mxu0 0
  %197 = vmatmul.mubr.bf16.gmra.mrb[0].mxu0 %v116
  %v198 = vpop.f32.mrb[0].mxu0
  %v199 = vadd.f32 0.0, %v198
  %v200 = vpop.f32.mrb[0].mxu0
  %v201 = vpop.f32.mrb[0].mxu0
  %v202 = vadd.f32 0.0, %v201
  %v203 = vpop.f32.mrb[0].mxu0
  %204 = vmatprep.mubr.bf16.mxu0 0
  %205 = vmatmul.mubr.bf16.gmra.mrb[0].mxu0 %v119
  %v206 = vpop.f32.mrb[0].mxu0
  %v207 = vadd.f32 0.0, %v206
  %v208 = vpop.f32.mrb[0].mxu0
  %v209 = vpop.f32.mrb[0].mxu0
  %v210 = vadd.f32 0.0, %v209
  %v211 = vpop.f32.mrb[0].mxu0
  %212 = vmatprep.mubr.bf16.mxu0 0
  %213 = vmatmul.mubr.bf16.gmra.mrb[0].mxu0 %v122
  %v214 = vpop.f32.mrb[0].mxu0
  %v215 = vadd.f32 0.0, %v214
  %v216 = vpop.f32.mrb[0].mxu0
  %v217 = vpop.f32.mrb[0].mxu0
  %v218 = vadd.f32 0.0, %v217
  %v219 = vpop.f32.mrb[0].mxu0
  %220 = vdwg.mxu0
  %v221 = vlaneseq
  %v222 = vand.u32 %v221, 127
  %v223 = vld [vmem:[%s0] sm:$0xff]
  %v224 = vld [vmem:[%s0 + $0x8] sm:$0xff]
  %v225 = vld [vmem:[%s0 + $0x10] sm:$0xff]
  %v226 = vld [vmem:[%s0 + $0x18] sm:$0xff]
  %v227 = vld [vmem:[%s0 + $0x20] sm:$0xff]
  %v228 = vld [vmem:[%s0 + $0x28] sm:$0xff]
  %v229 = vld [vmem:[%s0 + $0x30] sm:$0xff]
  %v230 = vld [vmem:[%s0 + $0x38] sm:$0xff]
  %231 = vset.pattern.permute.xlu0 0
  %232 = vperm.xlu0 %231, %v223
  %v233 = vpop.permute.xlu0 %232
  %234 = vset.pattern.permute.xlu0 0
  %235 = vperm.xlu0 %234, %v224
  %v236 = vpop.permute.xlu0 %235
  %237 = vset.pattern.permute.xlu0 0
  %238 = vperm.xlu0 %237, %v225
  %v239 = vpop.permute.xlu0 %238
  %240 = vset.pattern.permute.xlu0 0
  %241 = vperm.xlu0 %240, %v226
  %v242 = vpop.permute.xlu0 %241
  %243 = vset.pattern.permute.xlu0 0
  %244 = vperm.xlu0 %243, %v227
  %v245 = vpop.permute.xlu0 %244
  %246 = vset.pattern.permute.xlu0 0
  %247 = vperm.xlu0 %246, %v228
  %v248 = vpop.permute.xlu0 %247
  %249 = vset.pattern.permute.xlu0 0
  %250 = vperm.xlu0 %249, %v229
  %v251 = vpop.permute.xlu0 %250
  %252 = vset.pattern.permute.xlu0 0
  %253 = vperm.xlu0 %252, %v230
  %v254 = vpop.permute.xlu0 %253
  %vm255 = vcmp.eq.s32.totalorder %v222, %v233
  %vm256 = vcmp.eq.s32.totalorder %v222, %v236
  %vm257 = vcmp.eq.s32.totalorder %v222, %v239
  %vm258 = vcmp.eq.s32.totalorder %v222, %v242
  %vm259 = vcmp.eq.s32.totalorder %v222, %v245
  %vm260 = vcmp.eq.s32.totalorder %v222, %v248
  %vm261 = vcmp.eq.s32.totalorder %v222, %v251
  %vm262 = vcmp.eq.s32.totalorder %v222, %v254
  %v263 = vsel %vm255, 1, 0
  %v264 = vsel %vm256, 1, 0
  %v265 = vsel %vm257, 1, 0
  %v266 = vsel %vm258, 1, 0
  %v267 = vsel %vm259, 1, 0
  %v268 = vsel %vm260, 1, 0
  %v269 = vsel %vm261, 1, 0
  %v270 = vsel %vm262, 1, 0
  %v271 = vcvt.s32.f32 %v263
  %v272 = vcvt.s32.f32 %v264
  %v273 = vcvt.s32.f32 %v265
  %v274 = vcvt.s32.f32 %v266
  %v275 = vcvt.s32.f32 %v267
  %v276 = vcvt.s32.f32 %v268
  %v277 = vcvt.s32.f32 %v269
  %v278 = vcvt.s32.f32 %v270
  %v279 = vld [vmem:[%s4] sm:$0x1]
  %v281 = vlaneseq
  %v282 = vshrl.u32 %v281, 7
  %v283 = vsub.s32 0, %v282
  %v284 = vrot.slane %v279, %v283
  %286 = vmatprep.subr.mxu0 0.0
  %287 = vmatpush1.msra.mxu0 %v159
  %288 = vmatprep.subr.mxu0 0.0
  %289 = vmatpush1.msra.mxu0 %v162
  %290 = vmatprep.subr.mxu0 0.0
  %291 = vmatpush1.msra.mxu0 %v167
  %292 = vmatprep.subr.mxu0 0.0
  %293 = vmatpush1.msra.mxu0 %v170
  %294 = vmatprep.subr.mxu0 0.0
  %295 = vmatpush1.msra.mxu0 %v175
  %296 = vmatprep.subr.mxu0 0.0
  %297 = vmatpush1.msra.mxu0 %v178
  %298 = vmatprep.subr.mxu0 0.0
  %299 = vmatpush1.msra.mxu0 %v183
  %300 = vmatprep.subr.mxu0 0.0
  %301 = vmatpush1.msra.mxu0 %v186
  %302 = vmatprep.subr.mxu0 0.0
  %303 = vmatpush1.msra.mxu0 %v191
  %304 = vmatprep.subr.mxu0 0.0
  %305 = vmatpush1.msra.mxu0 %v194
  %306 = vmatprep.subr.mxu0 0.0
  %307 = vmatpush1.msra.mxu0 %v199
  %308 = vmatprep.subr.mxu0 0.0
  %309 = vmatpush1.msra.mxu0 %v202
  %310 = vmatprep.subr.mxu0 0.0
  %311 = vmatpush1.msra.mxu0 %v207
  %312 = vmatprep.subr.mxu0 0.0
  %313 = vmatpush1.msra.mxu0 %v210
  %314 = vmatprep.subr.mxu0 0.0
  %315 = vmatpush1.msra.mxu0 %v215
  %316 = vmatprep.subr.mxu0 0.0
  %317 = vmatpush1.msra.mxu0 %v218
  %318 = vmatprep.subr.mxu0 0.0
  %319 = vmatpush1.msra.mxu0 0.0
  %320 = vmatprep.subr.mxu0 0.0
  %321 = vmatpush1.msra.mxu0 0.0
  %322 = vmatprep.subr.mxu0 0.0
  %323 = vmatpush1.msra.mxu0 0.0
  %324 = vmatprep.subr.mxu0 0.0
  %325 = vmatpush1.msra.mxu0 0.0
  %326 = vmatprep.subr.mxu0 0.0
  %327 = vmatpush1.msra.mxu0 0.0
  %328 = vmatprep.subr.mxu0 0.0
  %329 = vmatpush1.msra.mxu0 0.0
  %330 = vmatprep.subr.mxu0 0.0
  %331 = vmatpush1.msra.mxu0 0.0
  %332 = vmatprep.subr.mxu0 0.0
  %333 = vmatpush1.msra.mxu0 0.0
  %334 = vmatprep.subr.mxu0 0.0
  %335 = vmatpush1.msra.mxu0 0.0
  %336 = vmatprep.subr.mxu0 0.0
  %337 = vmatpush1.msra.mxu0 0.0
  %338 = vmatprep.subr.mxu0 0.0
  %339 = vmatpush1.msra.mxu0 0.0
  %340 = vmatprep.subr.mxu0 0.0
  %341 = vmatpush1.msra.mxu0 0.0
  %342 = vmatprep.subr.mxu0 0.0
  %343 = vmatpush1.msra.mxu0 0.0
  %344 = vmatprep.subr.mxu0 0.0
  %345 = vmatpush1.msra.mxu0 0.0
  %346 = vmatprep.subr.mxu0 0.0
  %347 = vmatpush1.msra.mxu0 0.0
  %348 = vmatprep.subr.mxu0 0.0
  %349 = vmatpush1.msra.mxu0 0.0
  %350 = vmatprep.mubr.f32.mxu0 0.0
  %351 = vmatmul.mubr.f32.gmra.mrb[0].mxu0 %v271
  %v352 = vpop.f32.mrb[0].mxu0
  %v353 = vadd.f32 %v284, %v352
  %v354 = vpop.f32.mrb[0].mxu0
  %355 = vmatprep.mubr.f32.mxu0 0.0
  %356 = vmatmul.mubr.f32.gmra.mrb[0].mxu0 %v272
  %v357 = vpop.f32.mrb[0].mxu0
  %v358 = vadd.f32 %v284, %v357
  %v359 = vpop.f32.mrb[0].mxu0
  %360 = vmatprep.mubr.f32.mxu0 0.0
  %361 = vmatmul.mubr.f32.gmra.mrb[0].mxu0 %v273
  %v362 = vpop.f32.mrb[0].mxu0
  %v363 = vadd.f32 %v284, %v362
  %v364 = vpop.f32.mrb[0].mxu0
  %365 = vmatprep.mubr.f32.mxu0 0.0
  %366 = vmatmul.mubr.f32.gmra.mrb[0].mxu0 %v274
  %v367 = vpop.f32.mrb[0].mxu0
  %v368 = vadd.f32 %v284, %v367
  %v369 = vpop.f32.mrb[0].mxu0
  %370 = vmatprep.mubr.f32.mxu0 0.0
  %371 = vmatmul.mubr.f32.gmra.mrb[0].mxu0 %v275
  %v372 = vpop.f32.mrb[0].mxu0
  %v373 = vadd.f32 %v284, %v372
  %v374 = vpop.f32.mrb[0].mxu0
  %375 = vmatprep.mubr.f32.mxu0 0.0
  %376 = vmatmul.mubr.f32.gmra.mrb[0].mxu0 %v276
  %v377 = vpop.f32.mrb[0].mxu0
  %v378 = vadd.f32 %v284, %v377
  %v379 = vpop.f32.mrb[0].mxu0
  %380 = vmatprep.mubr.f32.mxu0 0.0
  %381 = vmatmul.mubr.f32.gmra.mrb[0].mxu0 %v277
  %v382 = vpop.f32.mrb[0].mxu0
  %v383 = vadd.f32 %v284, %v382
  %v384 = vpop.f32.mrb[0].mxu0
  %385 = vmatprep.mubr.f32.mxu0 0.0
  %386 = vmatmul.mubr.f32.gmra.mrb[0].mxu0 %v278
  %v387 = vpop.f32.mrb[0].mxu0
  %v388 = vadd.f32 %v284, %v387
  %v389 = vpop.f32.mrb[0].mxu0
  %390 = vdwg.mxu0
  %v391 = vld [vmem:[%s3] sm:$0xf]
  %v392 = vld [vmem:[%s3 + $0x4] sm:$0xf]
  %v393 = vld [vmem:[%s3 + $0x8] sm:$0xf]
  %v394 = vld [vmem:[%s3 + $0xc] sm:$0xf]
  %vm395 = vcmp.ge.s32.totalorder %v222, 64
  %vm396 = vcmp.lt.s32.totalorder %v222, 96
  %vm397 = vmand %vm395, %vm396
  %v398 = vsel %vm397, 1.0, 0.5
  %v403 = vunpack.c.l.b16 %v391
  %v404 = vunpack.c.l.b16 %v392
  %v405 = vunpack.c.l.b16 %v393
  %v406 = vunpack.c.l.b16 %v394
  %v407 = vpack.c.b16 %v404, %v403
  %v408 = vpack.c.b16 %v406, %v405
  %v412 = vsel %vm99, 0, 0
  %414 = vmatprep.subr.bf16.mxu0 0
  %415 = vmatpush1.bf16.msra.mxu0 %v407
  %416 = vmatprep.subr.bf16.mxu0 0
  %417 = vmatpush1.bf16.msra.mxu0 %v408
  %418 = vmatprep.subr.bf16.mxu0 0
  %419 = vmatpush1.bf16.msra.mxu0 0
  %420 = vmatprep.subr.bf16.mxu0 0
  %421 = vmatpush1.bf16.msra.mxu0 0
  %422 = vmatprep.subr.bf16.mxu0 0
  %423 = vmatpush1.bf16.msra.mxu0 0
  %424 = vmatprep.subr.bf16.mxu0 0
  %425 = vmatpush1.bf16.msra.mxu0 0
  %426 = vmatprep.subr.bf16.mxu0 0
  %427 = vmatpush1.bf16.msra.mxu0 0
  %428 = vmatprep.subr.bf16.mxu0 0
  %429 = vmatpush1.bf16.msra.mxu0 0
  %430 = vmatprep.subr.bf16.mxu0 0
  %431 = vmatpush1.bf16.msra.mxu0 0
  %432 = vmatprep.subr.bf16.mxu0 0
  %433 = vmatpush1.bf16.msra.mxu0 0
  %434 = vmatprep.subr.bf16.mxu0 0
  %435 = vmatpush1.bf16.msra.mxu0 0
  %436 = vmatprep.subr.bf16.mxu0 0
  %437 = vmatpush1.bf16.msra.mxu0 0
  %438 = vmatprep.subr.bf16.mxu0 0
  %439 = vmatpush1.bf16.msra.mxu0 0
  %440 = vmatprep.subr.bf16.mxu0 0
  %441 = vmatpush1.bf16.msra.mxu0 0
  %442 = vmatprep.subr.bf16.mxu0 0
  %443 = vmatpush1.bf16.msra.mxu0 0
  %444 = vmatprep.subr.bf16.mxu0 0
  %445 = vmatpush1.bf16.msra.mxu0 0
  %446 = vmatprep.mubr.bf16.mxu0 0
  %447 = vmatmul.mubr.bf16.gmra.mrb[0].mxu0 %v412
  %v448 = vpop.f32.mrb[0].mxu0
  %v449 = vadd.f32 0.0, %v448
  %v450 = vpop.f32.mrb[0].mxu0
  %v451 = vpop.f32.mrb[0].mxu0
  %v452 = vpop.f32.mrb[0].mxu0
  %453 = vdwg.mxu0
  %v454 = vadd.f32 %v353, %v449
  %v455 = vmul.f32 %v454, %v398
  %v456 = vtanh.pop %v455
  %v457 = vadd.f32 %v456, 1.0
  %v458 = vmul.f32 %v457, 0.5
  %v459 = vsel %vm397, %v456, %v458
  %v460 = vmul.f32 %v459, 0.0
  %462 = vrot.lane.b32.xlu0 %v459, 64
  %v463 = vpop.permute.xlu0 %462
  %v465 = vmul.f32 %v459, %v463
  %467 = vrot.lane.b32.xlu0 %v465, 32
  %v468 = vpop.permute.xlu0 %467
  %v470 = vadd.f32 %v460, %v468
  %v471 = vtanh.pop %v470
  %473 = vrot.lane.b32.xlu0 %v471, 64
  %v474 = vpop.permute.xlu0 %473
  %v476 = vmul.f32 %v459, %v474
  %v477 = vpack.c.bf16 %v476, %v476
  %479 = vrot.lane.b32.xlu0 %v477, 32
  %v480 = vpop.permute.xlu0 %479
  %v482 = vsel %vm99, %v480, 0
  %484 = vmatprep.subr.bf16.mxu0 0
  %485 = vmatpush1.bf16.msra.mxu0 %v407
  %486 = vmatprep.subr.bf16.mxu0 0
  %487 = vmatpush1.bf16.msra.mxu0 %v408
  %488 = vmatprep.subr.bf16.mxu0 0
  %489 = vmatpush1.bf16.msra.mxu0 0
  %490 = vmatprep.subr.bf16.mxu0 0
  %491 = vmatpush1.bf16.msra.mxu0 0
  %492 = vmatprep.subr.bf16.mxu0 0
  %493 = vmatpush1.bf16.msra.mxu0 0
  %494 = vmatprep.subr.bf16.mxu0 0
  %495 = vmatpush1.bf16.msra.mxu0 0
  %496 = vmatprep.subr.bf16.mxu0 0
  %497 = vmatpush1.bf16.msra.mxu0 0
  %498 = vmatprep.subr.bf16.mxu0 0
  %499 = vmatpush1.bf16.msra.mxu0 0
  %500 = vmatprep.subr.bf16.mxu0 0
  %501 = vmatpush1.bf16.msra.mxu0 0
  %502 = vmatprep.subr.bf16.mxu0 0
  %503 = vmatpush1.bf16.msra.mxu0 0
  %504 = vmatprep.subr.bf16.mxu0 0
  %505 = vmatpush1.bf16.msra.mxu0 0
  %506 = vmatprep.subr.bf16.mxu0 0
  %507 = vmatpush1.bf16.msra.mxu0 0
  %508 = vmatprep.subr.bf16.mxu0 0
  %509 = vmatpush1.bf16.msra.mxu0 0
  %510 = vmatprep.subr.bf16.mxu0 0
  %511 = vmatpush1.bf16.msra.mxu0 0
  %512 = vmatprep.subr.bf16.mxu0 0
  %513 = vmatpush1.bf16.msra.mxu0 0
  %514 = vmatprep.subr.bf16.mxu0 0
  %515 = vmatpush1.bf16.msra.mxu0 0
  %516 = vmatprep.mubr.bf16.mxu0 0
  %517 = vmatmul.mubr.bf16.gmra.mrb[0].mxu0 %v482
  %v518 = vpop.f32.mrb[0].mxu0
  %v519 = vadd.f32 0.0, %v518
  %v520 = vpop.f32.mrb[0].mxu0
  %v521 = vpop.f32.mrb[0].mxu0
  %v522 = vpop.f32.mrb[0].mxu0
  %523 = vdwg.mxu0
  %v524 = vadd.f32 %v358, %v519
  %v525 = vmul.f32 %v524, %v398
  %v526 = vtanh.pop %v525
  %v527 = vadd.f32 %v526, 1.0
  %v528 = vmul.f32 %v527, 0.5
  %v529 = vsel %vm397, %v526, %v528
  %v530 = vmul.f32 %v529, %v470
  %532 = vrot.lane.b32.xlu0 %v529, 64
  %v533 = vpop.permute.xlu0 %532
  %v535 = vmul.f32 %v529, %v533
  %537 = vrot.lane.b32.xlu0 %v535, 32
  %v538 = vpop.permute.xlu0 %537
  %v540 = vadd.f32 %v530, %v538
  %v541 = vtanh.pop %v540
  %543 = vrot.lane.b32.xlu0 %v541, 64
  %v544 = vpop.permute.xlu0 %543
  %v546 = vmul.f32 %v529, %v544
  %v547 = vpack.c.bf16 %v546, %v546
  %549 = vrot.lane.b32.xlu0 %v547, 32
  %v550 = vpop.permute.xlu0 %549
  %v552 = vsel %vm99, %v550, 0
  %554 = vmatprep.subr.bf16.mxu0 0
  %555 = vmatpush1.bf16.msra.mxu0 %v407
  %556 = vmatprep.subr.bf16.mxu0 0
  %557 = vmatpush1.bf16.msra.mxu0 %v408
  %558 = vmatprep.subr.bf16.mxu0 0
  %559 = vmatpush1.bf16.msra.mxu0 0
  %560 = vmatprep.subr.bf16.mxu0 0
  %561 = vmatpush1.bf16.msra.mxu0 0
  %562 = vmatprep.subr.bf16.mxu0 0
  %563 = vmatpush1.bf16.msra.mxu0 0
  %564 = vmatprep.subr.bf16.mxu0 0
  %565 = vmatpush1.bf16.msra.mxu0 0
  %566 = vmatprep.subr.bf16.mxu0 0
  %567 = vmatpush1.bf16.msra.mxu0 0
  %568 = vmatprep.subr.bf16.mxu0 0
  %569 = vmatpush1.bf16.msra.mxu0 0
  %570 = vmatprep.subr.bf16.mxu0 0
  %571 = vmatpush1.bf16.msra.mxu0 0
  %572 = vmatprep.subr.bf16.mxu0 0
  %573 = vmatpush1.bf16.msra.mxu0 0
  %574 = vmatprep.subr.bf16.mxu0 0
  %575 = vmatpush1.bf16.msra.mxu0 0
  %576 = vmatprep.subr.bf16.mxu0 0
  %577 = vmatpush1.bf16.msra.mxu0 0
  %578 = vmatprep.subr.bf16.mxu0 0
  %579 = vmatpush1.bf16.msra.mxu0 0
  %580 = vmatprep.subr.bf16.mxu0 0
  %581 = vmatpush1.bf16.msra.mxu0 0
  %582 = vmatprep.subr.bf16.mxu0 0
  %583 = vmatpush1.bf16.msra.mxu0 0
  %584 = vmatprep.subr.bf16.mxu0 0
  %585 = vmatpush1.bf16.msra.mxu0 0
  %586 = vmatprep.mubr.bf16.mxu0 0
  %587 = vmatmul.mubr.bf16.gmra.mrb[0].mxu0 %v552
  %v588 = vpop.f32.mrb[0].mxu0
  %v589 = vadd.f32 0.0, %v588
  %v590 = vpop.f32.mrb[0].mxu0
  %v591 = vpop.f32.mrb[0].mxu0
  %v592 = vpop.f32.mrb[0].mxu0
  %593 = vdwg.mxu0
  %v594 = vadd.f32 %v363, %v589
  %v595 = vmul.f32 %v594, %v398
  %v596 = vtanh.pop %v595
  %v597 = vadd.f32 %v596, 1.0
  %v598 = vmul.f32 %v597, 0.5
  %v599 = vsel %vm397, %v596, %v598
  %v600 = vmul.f32 %v599, %v540
  %602 = vrot.lane.b32.xlu0 %v599, 64
  %v603 = vpop.permute.xlu0 %602
  %v605 = vmul.f32 %v599, %v603
  %607 = vrot.lane.b32.xlu0 %v605, 32
  %v608 = vpop.permute.xlu0 %607
  %v610 = vadd.f32 %v600, %v608
  %v611 = vtanh.pop %v610
  %613 = vrot.lane.b32.xlu0 %v611, 64
  %v614 = vpop.permute.xlu0 %613
  %v616 = vmul.f32 %v599, %v614
  %v617 = vpack.c.bf16 %v616, %v616
  %619 = vrot.lane.b32.xlu0 %v617, 32
  %v620 = vpop.permute.xlu0 %619
  %v622 = vsel %vm99, %v620, 0
  %624 = vmatprep.subr.bf16.mxu0 0
  %625 = vmatpush1.bf16.msra.mxu0 %v407
  %626 = vmatprep.subr.bf16.mxu0 0
  %627 = vmatpush1.bf16.msra.mxu0 %v408
  %628 = vmatprep.subr.bf16.mxu0 0
  %629 = vmatpush1.bf16.msra.mxu0 0
  %630 = vmatprep.subr.bf16.mxu0 0
  %631 = vmatpush1.bf16.msra.mxu0 0
  %632 = vmatprep.subr.bf16.mxu0 0
  %633 = vmatpush1.bf16.msra.mxu0 0
  %634 = vmatprep.subr.bf16.mxu0 0
  %635 = vmatpush1.bf16.msra.mxu0 0
  %636 = vmatprep.subr.bf16.mxu0 0
  %637 = vmatpush1.bf16.msra.mxu0 0
  %638 = vmatprep.subr.bf16.mxu0 0
  %639 = vmatpush1.bf16.msra.mxu0 0
  %640 = vmatprep.subr.bf16.mxu0 0
  %641 = vmatpush1.bf16.msra.mxu0 0
  %642 = vmatprep.subr.bf16.mxu0 0
  %643 = vmatpush1.bf16.msra.mxu0 0
  %644 = vmatprep.subr.bf16.mxu0 0
  %645 = vmatpush1.bf16.msra.mxu0 0
  %646 = vmatprep.subr.bf16.mxu0 0
  %647 = vmatpush1.bf16.msra.mxu0 0
  %648 = vmatprep.subr.bf16.mxu0 0
  %649 = vmatpush1.bf16.msra.mxu0 0
  %650 = vmatprep.subr.bf16.mxu0 0
  %651 = vmatpush1.bf16.msra.mxu0 0
  %652 = vmatprep.subr.bf16.mxu0 0
  %653 = vmatpush1.bf16.msra.mxu0 0
  %654 = vmatprep.subr.bf16.mxu0 0
  %655 = vmatpush1.bf16.msra.mxu0 0
  %656 = vmatprep.mubr.bf16.mxu0 0
  %657 = vmatmul.mubr.bf16.gmra.mrb[0].mxu0 %v622
  %v658 = vpop.f32.mrb[0].mxu0
  %v659 = vadd.f32 0.0, %v658
  %v660 = vpop.f32.mrb[0].mxu0
  %v661 = vpop.f32.mrb[0].mxu0
  %v662 = vpop.f32.mrb[0].mxu0
  %663 = vdwg.mxu0
  %v664 = vadd.f32 %v368, %v659
  %v665 = vmul.f32 %v664, %v398
  %v666 = vtanh.pop %v665
  %v667 = vadd.f32 %v666, 1.0
  %v668 = vmul.f32 %v667, 0.5
  %v669 = vsel %vm397, %v666, %v668
  %v670 = vmul.f32 %v669, %v610
  %672 = vrot.lane.b32.xlu0 %v669, 64
  %v673 = vpop.permute.xlu0 %672
  %v675 = vmul.f32 %v669, %v673
  %677 = vrot.lane.b32.xlu0 %v675, 32
  %v678 = vpop.permute.xlu0 %677
  %v680 = vadd.f32 %v670, %v678
  %v681 = vtanh.pop %v680
  %683 = vrot.lane.b32.xlu0 %v681, 64
  %v684 = vpop.permute.xlu0 %683
  %v686 = vmul.f32 %v669, %v684
  %v687 = vpack.c.bf16 %v686, %v686
  %689 = vrot.lane.b32.xlu0 %v687, 32
  %v690 = vpop.permute.xlu0 %689
  %v692 = vsel %vm99, %v690, 0
  %694 = vmatprep.subr.bf16.mxu0 0
  %695 = vmatpush1.bf16.msra.mxu0 %v407
  %696 = vmatprep.subr.bf16.mxu0 0
  %697 = vmatpush1.bf16.msra.mxu0 %v408
  %698 = vmatprep.subr.bf16.mxu0 0
  %699 = vmatpush1.bf16.msra.mxu0 0
  %700 = vmatprep.subr.bf16.mxu0 0
  %701 = vmatpush1.bf16.msra.mxu0 0
  %702 = vmatprep.subr.bf16.mxu0 0
  %703 = vmatpush1.bf16.msra.mxu0 0
  %704 = vmatprep.subr.bf16.mxu0 0
  %705 = vmatpush1.bf16.msra.mxu0 0
  %706 = vmatprep.subr.bf16.mxu0 0
  %707 = vmatpush1.bf16.msra.mxu0 0
  %708 = vmatprep.subr.bf16.mxu0 0
  %709 = vmatpush1.bf16.msra.mxu0 0
  %710 = vmatprep.subr.bf16.mxu0 0
  %711 = vmatpush1.bf16.msra.mxu0 0
  %712 = vmatprep.subr.bf16.mxu0 0
  %713 = vmatpush1.bf16.msra.mxu0 0
  %714 = vmatprep.subr.bf16.mxu0 0
  %715 = vmatpush1.bf16.msra.mxu0 0
  %716 = vmatprep.subr.bf16.mxu0 0
  %717 = vmatpush1.bf16.msra.mxu0 0
  %718 = vmatprep.subr.bf16.mxu0 0
  %719 = vmatpush1.bf16.msra.mxu0 0
  %720 = vmatprep.subr.bf16.mxu0 0
  %721 = vmatpush1.bf16.msra.mxu0 0
  %722 = vmatprep.subr.bf16.mxu0 0
  %723 = vmatpush1.bf16.msra.mxu0 0
  %724 = vmatprep.subr.bf16.mxu0 0
  %725 = vmatpush1.bf16.msra.mxu0 0
  %726 = vmatprep.mubr.bf16.mxu0 0
  %727 = vmatmul.mubr.bf16.gmra.mrb[0].mxu0 %v692
  %v728 = vpop.f32.mrb[0].mxu0
  %v729 = vadd.f32 0.0, %v728
  %v730 = vpop.f32.mrb[0].mxu0
  %v731 = vpop.f32.mrb[0].mxu0
  %v732 = vpop.f32.mrb[0].mxu0
  %733 = vdwg.mxu0
  %v734 = vadd.f32 %v373, %v729
  %v735 = vmul.f32 %v734, %v398
  %v736 = vtanh.pop %v735
  %v737 = vadd.f32 %v736, 1.0
  %v738 = vmul.f32 %v737, 0.5
  %v739 = vsel %vm397, %v736, %v738
  %v740 = vmul.f32 %v739, %v680
  %742 = vrot.lane.b32.xlu0 %v739, 64
  %v743 = vpop.permute.xlu0 %742
  %v745 = vmul.f32 %v739, %v743
  %747 = vrot.lane.b32.xlu0 %v745, 32
  %v748 = vpop.permute.xlu0 %747
  %v750 = vadd.f32 %v740, %v748
  %v751 = vtanh.pop %v750
  %753 = vrot.lane.b32.xlu0 %v751, 64
  %v754 = vpop.permute.xlu0 %753
  %v756 = vmul.f32 %v739, %v754
  %v757 = vpack.c.bf16 %v756, %v756
  %759 = vrot.lane.b32.xlu0 %v757, 32
  %v760 = vpop.permute.xlu0 %759
  %v762 = vsel %vm99, %v760, 0
  %764 = vmatprep.subr.bf16.mxu0 0
  %765 = vmatpush1.bf16.msra.mxu0 %v407
  %766 = vmatprep.subr.bf16.mxu0 0
  %767 = vmatpush1.bf16.msra.mxu0 %v408
  %768 = vmatprep.subr.bf16.mxu0 0
  %769 = vmatpush1.bf16.msra.mxu0 0
  %770 = vmatprep.subr.bf16.mxu0 0
  %771 = vmatpush1.bf16.msra.mxu0 0
  %772 = vmatprep.subr.bf16.mxu0 0
  %773 = vmatpush1.bf16.msra.mxu0 0
  %774 = vmatprep.subr.bf16.mxu0 0
  %775 = vmatpush1.bf16.msra.mxu0 0
  %776 = vmatprep.subr.bf16.mxu0 0
  %777 = vmatpush1.bf16.msra.mxu0 0
  %778 = vmatprep.subr.bf16.mxu0 0
  %779 = vmatpush1.bf16.msra.mxu0 0
  %780 = vmatprep.subr.bf16.mxu0 0
  %781 = vmatpush1.bf16.msra.mxu0 0
  %782 = vmatprep.subr.bf16.mxu0 0
  %783 = vmatpush1.bf16.msra.mxu0 0
  %784 = vmatprep.subr.bf16.mxu0 0
  %785 = vmatpush1.bf16.msra.mxu0 0
  %786 = vmatprep.subr.bf16.mxu0 0
  %787 = vmatpush1.bf16.msra.mxu0 0
  %788 = vmatprep.subr.bf16.mxu0 0
  %789 = vmatpush1.bf16.msra.mxu0 0
  %790 = vmatprep.subr.bf16.mxu0 0
  %791 = vmatpush1.bf16.msra.mxu0 0
  %792 = vmatprep.subr.bf16.mxu0 0
  %793 = vmatpush1.bf16.msra.mxu0 0
  %794 = vmatprep.subr.bf16.mxu0 0
  %795 = vmatpush1.bf16.msra.mxu0 0
  %796 = vmatprep.mubr.bf16.mxu0 0
  %797 = vmatmul.mubr.bf16.gmra.mrb[0].mxu0 %v762
  %v798 = vpop.f32.mrb[0].mxu0
  %v799 = vadd.f32 0.0, %v798
  %v800 = vpop.f32.mrb[0].mxu0
  %v801 = vpop.f32.mrb[0].mxu0
  %v802 = vpop.f32.mrb[0].mxu0
  %803 = vdwg.mxu0
  %v804 = vadd.f32 %v378, %v799
  %v805 = vmul.f32 %v804, %v398
  %v806 = vtanh.pop %v805
  %v807 = vadd.f32 %v806, 1.0
  %v808 = vmul.f32 %v807, 0.5
  %v809 = vsel %vm397, %v806, %v808
  %v810 = vmul.f32 %v809, %v750
  %812 = vrot.lane.b32.xlu0 %v809, 64
  %v813 = vpop.permute.xlu0 %812
  %v815 = vmul.f32 %v809, %v813
  %817 = vrot.lane.b32.xlu0 %v815, 32
  %v818 = vpop.permute.xlu0 %817
  %v820 = vadd.f32 %v810, %v818
  %v821 = vtanh.pop %v820
  %823 = vrot.lane.b32.xlu0 %v821, 64
  %v824 = vpop.permute.xlu0 %823
  %v826 = vmul.f32 %v809, %v824
  %v827 = vpack.c.bf16 %v826, %v826
  %829 = vrot.lane.b32.xlu0 %v827, 32
  %v830 = vpop.permute.xlu0 %829
  %v832 = vsel %vm99, %v830, 0
  %834 = vmatprep.subr.bf16.mxu0 0
  %835 = vmatpush1.bf16.msra.mxu0 %v407
  %836 = vmatprep.subr.bf16.mxu0 0
  %837 = vmatpush1.bf16.msra.mxu0 %v408
  %838 = vmatprep.subr.bf16.mxu0 0
  %839 = vmatpush1.bf16.msra.mxu0 0
  %840 = vmatprep.subr.bf16.mxu0 0
  %841 = vmatpush1.bf16.msra.mxu0 0
  %842 = vmatprep.subr.bf16.mxu0 0
  %843 = vmatpush1.bf16.msra.mxu0 0
  %844 = vmatprep.subr.bf16.mxu0 0
  %845 = vmatpush1.bf16.msra.mxu0 0
  %846 = vmatprep.subr.bf16.mxu0 0
  %847 = vmatpush1.bf16.msra.mxu0 0
  %848 = vmatprep.subr.bf16.mxu0 0
  %849 = vmatpush1.bf16.msra.mxu0 0
  %850 = vmatprep.subr.bf16.mxu0 0
  %851 = vmatpush1.bf16.msra.mxu0 0
  %852 = vmatprep.subr.bf16.mxu0 0
  %853 = vmatpush1.bf16.msra.mxu0 0
  %854 = vmatprep.subr.bf16.mxu0 0
  %855 = vmatpush1.bf16.msra.mxu0 0
  %856 = vmatprep.subr.bf16.mxu0 0
  %857 = vmatpush1.bf16.msra.mxu0 0
  %858 = vmatprep.subr.bf16.mxu0 0
  %859 = vmatpush1.bf16.msra.mxu0 0
  %860 = vmatprep.subr.bf16.mxu0 0
  %861 = vmatpush1.bf16.msra.mxu0 0
  %862 = vmatprep.subr.bf16.mxu0 0
  %863 = vmatpush1.bf16.msra.mxu0 0
  %864 = vmatprep.subr.bf16.mxu0 0
  %865 = vmatpush1.bf16.msra.mxu0 0
  %866 = vmatprep.mubr.bf16.mxu0 0
  %867 = vmatmul.mubr.bf16.gmra.mrb[0].mxu0 %v832
  %v868 = vpop.f32.mrb[0].mxu0
  %v869 = vadd.f32 0.0, %v868
  %v870 = vpop.f32.mrb[0].mxu0
  %v871 = vpop.f32.mrb[0].mxu0
  %v872 = vpop.f32.mrb[0].mxu0
  %873 = vdwg.mxu0
  %v874 = vadd.f32 %v383, %v869
  %v875 = vmul.f32 %v874, %v398
  %v876 = vtanh.pop %v875
  %v877 = vadd.f32 %v876, 1.0
  %v878 = vmul.f32 %v877, 0.5
  %v879 = vsel %vm397, %v876, %v878
  %v880 = vmul.f32 %v879, %v820
  %882 = vrot.lane.b32.xlu0 %v879, 64
  %v883 = vpop.permute.xlu0 %882
  %v885 = vmul.f32 %v879, %v883
  %887 = vrot.lane.b32.xlu0 %v885, 32
  %v888 = vpop.permute.xlu0 %887
  %v890 = vadd.f32 %v880, %v888
  %v891 = vtanh.pop %v890
  %893 = vrot.lane.b32.xlu0 %v891, 64
  %v894 = vpop.permute.xlu0 %893
  %v896 = vmul.f32 %v879, %v894
  %v897 = vpack.c.bf16 %v896, %v896
  %899 = vrot.lane.b32.xlu0 %v897, 32
  %v900 = vpop.permute.xlu0 %899
  %v902 = vsel %vm99, %v900, 0
  %904 = vmatprep.subr.bf16.mxu0 0
  %905 = vmatpush1.bf16.msra.mxu0 %v407
  %906 = vmatprep.subr.bf16.mxu0 0
  %907 = vmatpush1.bf16.msra.mxu0 %v408
  %908 = vmatprep.subr.bf16.mxu0 0
  %909 = vmatpush1.bf16.msra.mxu0 0
  %910 = vmatprep.subr.bf16.mxu0 0
  %911 = vmatpush1.bf16.msra.mxu0 0
  %912 = vmatprep.subr.bf16.mxu0 0
  %913 = vmatpush1.bf16.msra.mxu0 0
  %914 = vmatprep.subr.bf16.mxu0 0
  %915 = vmatpush1.bf16.msra.mxu0 0
  %916 = vmatprep.subr.bf16.mxu0 0
  %917 = vmatpush1.bf16.msra.mxu0 0
  %918 = vmatprep.subr.bf16.mxu0 0
  %919 = vmatpush1.bf16.msra.mxu0 0
  %920 = vmatprep.subr.bf16.mxu0 0
  %921 = vmatpush1.bf16.msra.mxu0 0
  %922 = vmatprep.subr.bf16.mxu0 0
  %923 = vmatpush1.bf16.msra.mxu0 0
  %924 = vmatprep.subr.bf16.mxu0 0
  %925 = vmatpush1.bf16.msra.mxu0 0
  %926 = vmatprep.subr.bf16.mxu0 0
  %927 = vmatpush1.bf16.msra.mxu0 0
  %928 = vmatprep.subr.bf16.mxu0 0
  %929 = vmatpush1.bf16.msra.mxu0 0
  %930 = vmatprep.subr.bf16.mxu0 0
  %931 = vmatpush1.bf16.msra.mxu0 0
  %932 = vmatprep.subr.bf16.mxu0 0
  %933 = vmatpush1.bf16.msra.mxu0 0
  %934 = vmatprep.subr.bf16.mxu0 0
  %935 = vmatpush1.bf16.msra.mxu0 0
  %936 = vmatprep.mubr.bf16.mxu0 0
  %937 = vmatmul.mubr.bf16.gmra.mrb[0].mxu0 %v902
  %v938 = vpop.f32.mrb[0].mxu0
  %v939 = vadd.f32 0.0, %v938
  %v940 = vpop.f32.mrb[0].mxu0
  %v941 = vpop.f32.mrb[0].mxu0
  %v942 = vpop.f32.mrb[0].mxu0
  %943 = vdwg.mxu0
  %v944 = vadd.f32 %v388, %v939
  %v945 = vmul.f32 %v944, %v398
  %v946 = vtanh.pop %v945
  %v947 = vadd.f32 %v946, 1.0
  %v948 = vmul.f32 %v947, 0.5
  %v949 = vsel %vm397, %v946, %v948
  %v950 = vmul.f32 %v949, %v890
  %952 = vrot.lane.b32.xlu0 %v949, 64
  %v953 = vpop.permute.xlu0 %952
  %v955 = vmul.f32 %v949, %v953
  %957 = vrot.lane.b32.xlu0 %v955, 32
  %v958 = vpop.permute.xlu0 %957
  %v960 = vadd.f32 %v950, %v958
  %v961 = vtanh.pop %v960
  %963 = vrot.lane.b32.xlu0 %v961, 64
  %v964 = vpop.permute.xlu0 %963
  %v966 = vmul.f32 %v949, %v964
  %v967 = vpack.c.bf16 %v966, %v966
  %v968 = vld [vmem:[%s5] sm:$0xf]
  %v969 = vld [vmem:[%s5 + $0x4] sm:$0xf]
  %v970 = vld [vmem:[%s5 + $0x8] sm:$0xf]
  %v971 = vld [vmem:[%s5 + $0xc] sm:$0xf]
  %v972 = vld [vmem:[%s6] sm:$0x1]
  %v974 = vlaneseq
  %v975 = vshrl.u32 %v974, 7
  %v976 = vsub.s32 0, %v975
  %v977 = vrot.slane %v972, %v976
  %980 = vrot.lane.b32.xlu0 %v967, 32
  %v981 = vpop.permute.xlu0 %980
  %v986 = vunpack.c.l.b16 %v968
  %v987 = vunpack.c.l.b16 %v969
  %v988 = vunpack.c.l.b16 %v970
  %v989 = vunpack.c.l.b16 %v971
  %v990 = vpack.c.b16 %v987, %v986
  %v991 = vpack.c.b16 %v989, %v988
  %v995 = vsel %vm99, %v981, 0
  %997 = vmatprep.subr.bf16.mxu0 0
  %998 = vmatpush1.bf16.msra.mxu0 %v990
  %999 = vmatprep.subr.bf16.mxu0 0
  %1000 = vmatpush1.bf16.msra.mxu0 %v991
  %1001 = vmatprep.subr.bf16.mxu0 0
  %1002 = vmatpush1.bf16.msra.mxu0 0
  %1003 = vmatprep.subr.bf16.mxu0 0
  %1004 = vmatpush1.bf16.msra.mxu0 0
  %1005 = vmatprep.subr.bf16.mxu0 0
  %1006 = vmatpush1.bf16.msra.mxu0 0
  %1007 = vmatprep.subr.bf16.mxu0 0
  %1008 = vmatpush1.bf16.msra.mxu0 0
  %1009 = vmatprep.subr.bf16.mxu0 0
  %1010 = vmatpush1.bf16.msra.mxu0 0
  %1011 = vmatprep.subr.bf16.mxu0 0
  %1012 = vmatpush1.bf16.msra.mxu0 0
  %1013 = vmatprep.subr.bf16.mxu0 0
  %1014 = vmatpush1.bf16.msra.mxu0 0
  %1015 = vmatprep.subr.bf16.mxu0 0
  %1016 = vmatpush1.bf16.msra.mxu0 0
  %1017 = vmatprep.subr.bf16.mxu0 0
  %1018 = vmatpush1.bf16.msra.mxu0 0
  %1019 = vmatprep.subr.bf16.mxu0 0
  %1020 = vmatpush1.bf16.msra.mxu0 0
  %1021 = vmatprep.subr.bf16.mxu0 0
  %1022 = vmatpush1.bf16.msra.mxu0 0
  %1023 = vmatprep.subr.bf16.mxu0 0
  %1024 = vmatpush1.bf16.msra.mxu0 0
  %1025 = vmatprep.subr.bf16.mxu0 0
  %1026 = vmatpush1.bf16.msra.mxu0 0
  %1027 = vmatprep.subr.bf16.mxu0 0
  %1028 = vmatpush1.bf16.msra.mxu0 0
  %1029 = vmatprep.mubr.bf16.mxu0 0
  %1030 = vmatmul.mubr.bf16.gmra.mrb[0].mxu0 %v995
  %v1031 = vpop.f32.mrb[0].mxu0
  %v1032 = vadd.f32 %v977, %v1031
  %v1033 = vpop.f32.mrb[0].mxu0
  %v1034 = vpop.f32.mrb[0].mxu0
  %v1035 = vpop.f32.mrb[0].mxu0
  %1036 = vdwg.mxu0
  %1037 = vst [vmem:[%s7] sm:$0xff] %v1032
  // Predicated region
  $region30: #{_net_forward_impl.1} parent=0 // pred_check
    _
  $region31: #{_net_forward_impl.1} parent=0 // pred_check_branch
    %1039 = sbr.rel (0) target = $region33
  $region32: #{_net_forward_impl.1} parent=0 // pred_region
    _
  $region33: #{_net_forward_impl.1} parent=0 // pred_fallthru
    _
  // Predicated region
  $region34: #{_net_forward_impl.1} parent=0 // pred_check
    _
  $region35: #{_net_forward_impl.1} parent=0 // pred_check_branch
    %1041 = sbr.rel (0) target = $region37
  $region36: #{_net_forward_impl.1} parent=0 // pred_region
    _
  $region37: #{_net_forward_impl.1} parent=0 // pred_fallthru
    _

</llo_original>
